<compile_context>
chip_gen: v6e
topology: v6e:2x2x1
jax: 0.10.0
libtpu: 0.0.40
codegen_flags: <defaults>
</compile_context>

<pallas_src>
import math

import jax
import jax.numpy as jnp
from jax.experimental import pallas as pl
from jax.experimental.pallas import tpu as pltpu


def _round_up(a, b):
    return ((a + b - 1) // b) * b


def _metric_embedding_kernel(x_ref, w_ref, b_ref, o_ref):
    # K is tiny, so the matmul is negligible; this kernel is elementwise/HBM bound.
    x = x_ref[...].astype(jnp.float32)
    w = w_ref[...].astype(jnp.float32)
    z = jnp.dot(x, w, preferred_element_type=jnp.float32)    # MXU
    z = z + b_ref[...].astype(jnp.float32)                    # (1, N) bias broadcast

    # Mish via u = 1 + exp(z):  tanh(softplus(z)) = (u^2 - 1) / (u^2 + 1)
    zc = jnp.minimum(z, jnp.float32(20.0))                    # overflow guard for exp
    e = jnp.exp(zc)                                           # EUP #1
    u = 1.0 + e
    u2 = u * u
    t = (u2 - 1.0) / (u2 + 1.0)                               # EUP rcp + VPU refine
    mish = z * t
    out = jnp.where(z > 20.0, z, mish)                        # mish(z) ~= z for large z
    o_ref[...] = out.astype(o_ref.dtype)


def metric_embedding(inputs, embedding_matrix, bias, *, tile_rows=1024):
    """inputs: (..., num_metrics) -> (..., embedding_dim);  y = mish(x @ W + b)."""
    *lead, k = inputs.shape
    n = embedding_matrix.shape[1]
    m = 1
    for d in lead:
        m *= d

    out_dtype = inputs.dtype

    # Lane-dense packing factor: make the physical output last dim 128 lanes wide.
    pack = 128 // n if (n < 128 and 128 % n == 0) else 1

    x2d = inputs.reshape(m, k)
    m_packed = _round_up(max(m, 1), pack) // pack
    pad_rows = m_packed * pack - m
    if pad_rows:
        x2d = jnp.pad(x2d, ((0, pad_rows), (0, 0)))
    xp = x2d.reshape(m_packed, pack * k)

    # Block-diagonal replicated weights / tiled bias (tiny, built once outside kernel).
    if pack > 1:
        w_bd = jnp.kron(jnp.eye(pack, dtype=embedding_matrix.dtype), embedding_matrix)
        b_bd = jnp.tile(bias.reshape(1, n), (1, pack))
    else:
        w_bd = embedding_matrix
        b_bd = bias.reshape(1, n)
    kp = pack * k
    np_ = pack * n

    # M-tiled grid; sublane (second-to-last) dim of every block is a multiple of 8.
    tm = min(tile_rows, _round_up(m_packed, 8))
    m_grid = _round_up(m_packed, tm)
    if m_grid != m_packed:
        xp = jnp.pad(xp, ((0, m_grid - m_packed), (0, 0)))
    grid = (m_grid // tm,)

    out2d = pl.pallas_call(
        _metric_embedding_kernel,
        out_shape=jax.ShapeDtypeStruct((m_grid, np_), out_dtype),
        grid_spec=pltpu.PrefetchScalarGridSpec(
            num_scalar_prefetch=0,
            grid=grid,
            in_specs=[
                pl.BlockSpec((tm, kp), lambda i: (i, 0)),     # streamed activations
                pl.BlockSpec((kp, np_), lambda i: (0, 0)),    # resident weights
                pl.BlockSpec((1, np_), lambda i: (0, 0)),     # resident bias
            ],
            out_specs=pl.BlockSpec((tm, np_), lambda i: (i, 0)),
        ),
        compiler_params=pltpu.CompilerParams(
            dimension_semantics=("parallel",),                # shard M across TCs
        ),
    )(xp, w_bd, b_bd)

    out = out2d[:m_packed].reshape(m_packed * pack, n)[:m]
    return out.reshape(*lead, n)


def init_params(key, num_metrics, embedding_dim):
    # Mirrors nn.init.kaiming_normal_ on a (num_metrics, embedding_dim) tensor:
    # fan_in = dim 1 (embedding_dim), std = sqrt(2 / fan_in).
    std = math.sqrt(2.0 / embedding_dim)
    embedding_matrix = std * jax.random.normal(
        key, (num_metrics, embedding_dim), dtype=jnp.float32
    )
    bias = jnp.zeros((embedding_dim,), dtype=jnp.float32)
    return embedding_matrix, bias


if __name__ == "__main__":
    key = jax.random.PRNGKey(0)
    k_w, k_x = jax.random.split(key)

    batch, seq = 2, 8
    num_metrics, embedding_dim = 4, 32

    embedding_matrix, bias = init_params(k_w, num_metrics, embedding_dim)
    inputs = jax.random.normal(k_x, (batch, seq, num_metrics), dtype=jnp.float32)

    out = metric_embedding(inputs, embedding_matrix, bias)
    out = jax.block_until_ready(out)

    # Pure-JAX reference check.
    z_ref = inputs @ embedding_matrix + bias
    ref = z_ref * jnp.tanh(jax.nn.softplus(z_ref))
    assert out.shape == (batch, seq, embedding_dim)
    assert jnp.allclose(out, ref, atol=1e-4, rtol=1e-4), (
        float(jnp.max(jnp.abs(out - ref)))
    )

    print("KERNEL_OK")
</pallas_src>

<mosaic_0001>
module attributes {stable_mosaic.version = 11 : i64} {
  func.func @_metric_embedding_kernel(%arg0: i32, %arg1: memref<8x16xf32, #tpu.memory_space<vmem>>, %arg2: memref<16x128xf32, #tpu.memory_space<vmem>>, %arg3: memref<1x128xf32, #tpu.memory_space<vmem>>, %arg4: memref<8x128xf32, #tpu.memory_space<vmem>>) attributes {dimension_semantics = [#tpu.dimension_semantics<parallel>], iteration_bounds = array<i64: 1>, scalar_prefetch = 0 : i64, scratch_operands = 0 : i64, tpu.core_type = #tpu.core_type<tc>, window_params = [{transform_indices = @transform_0, window_bounds = array<i64: 8, 16>}, {pipeline_mode = #tpu.pipeline_mode<synchronous>, transform_indices = @transform_1, window_bounds = array<i64: 16, 128>}, {pipeline_mode = #tpu.pipeline_mode<synchronous>, transform_indices = @transform_2, window_bounds = array<i64: 1, 128>}, {transform_indices = @transform_3, window_bounds = array<i64: 8, 128>}]} {
    %c0 = arith.constant 0 : index
    %c0_0 = arith.constant 0 : index
    %0 = vector.load %arg1[%c0, %c0_0] : memref<8x16xf32, #tpu.memory_space<vmem>>, vector<8x16xf32>
    %c0_1 = arith.constant 0 : index
    %c0_2 = arith.constant 0 : index
    %1 = vector.load %arg2[%c0_1, %c0_2] : memref<16x128xf32, #tpu.memory_space<vmem>>, vector<16x128xf32>
    %cst = arith.constant dense<0.000000e+00> : vector<8x128xf32>
    %2 = tpu.matmul %0, %1, %cst {dimension_numbers = #tpu.dot_dimension_numbers<[1], [0], [0], [1], [0, 0, 1, 1], [], []>} : vector<8x16xf32>, vector<16x128xf32>, vector<8x128xf32> -> vector<8x128xf32>
    %c0_3 = arith.constant 0 : index
    %c0_4 = arith.constant 0 : index
    %3 = vector.load %arg3[%c0_3, %c0_4] : memref<1x128xf32, #tpu.memory_space<vmem>>, vector<1x128xf32>
    %4 = vector.broadcast %3 : vector<1x128xf32> to vector<8x128xf32>
    %5 = arith.addf %2, %4 : vector<8x128xf32>
    %cst_5 = arith.constant 2.000000e+01 : f32
    %6 = vector.broadcast %cst_5 : f32 to vector<8x128xf32>
    %7 = arith.minimumf %5, %6 : vector<8x128xf32>
    %8 = math.exp %7 : vector<8x128xf32>
    %cst_6 = arith.constant 1.000000e+00 : f32
    %9 = vector.broadcast %cst_6 : f32 to vector<8x128xf32>
    %10 = arith.addf %9, %8 : vector<8x128xf32>
    %11 = arith.mulf %10, %10 : vector<8x128xf32>
    %cst_7 = arith.constant 1.000000e+00 : f32
    %12 = vector.broadcast %cst_7 : f32 to vector<8x128xf32>
    %13 = arith.subf %11, %12 : vector<8x128xf32>
    %cst_8 = arith.constant 1.000000e+00 : f32
    %14 = vector.broadcast %cst_8 : f32 to vector<8x128xf32>
    %15 = arith.addf %11, %14 : vector<8x128xf32>
    %16 = arith.divf %13, %15 : vector<8x128xf32>
    %17 = arith.mulf %5, %16 : vector<8x128xf32>
    %cst_9 = arith.constant 2.000000e+01 : f32
    %18 = vector.broadcast %cst_9 : f32 to vector<8x128xf32>
    %19 = arith.cmpf ogt, %5, %18 : vector<8x128xf32>
    %20 = arith.select %19, %5, %17 : vector<8x128xi1>, vector<8x128xf32>
    %c0_10 = arith.constant 0 : index
    %c0_11 = arith.constant 0 : index
    %21 = vector.load %arg4[%c0_10, %c0_11] : memref<8x128xf32, #tpu.memory_space<vmem>>, vector<8x128xf32>
    tpu.vector_store %arg4[%c0_10, %c0_11], %20 {strides = array<i32>} : memref<8x128xf32, #tpu.memory_space<vmem>>, vector<8x128xf32>,
    return
  }
  func.func @transform_0(%arg0: i32) -> (i32, i32) {
    %c0_i32 = arith.constant 0 : i32
    %c0_i32_0 = arith.constant 0 : i32
    return %arg0, %c0_i32 : i32, i32
  }
  func.func @transform_1(%arg0: i32) -> (i32, i32) {
    %c0_i32 = arith.constant 0 : i32
    %c0_i32_0 = arith.constant 0 : i32
    %c0_i32_1 = arith.constant 0 : i32
    return %c0_i32, %c0_i32_0 : i32, i32
  }
  func.func @transform_2(%arg0: i32) -> (i32, i32) {
    %c0_i32 = arith.constant 0 : i32
    %c0_i32_0 = arith.constant 0 : i32
    %c0_i32_1 = arith.constant 0 : i32
    return %c0_i32, %c0_i32_0 : i32, i32
  }
  func.func @transform_3(%arg0: i32) -> (i32, i32) {
    %c0_i32 = arith.constant 0 : i32
    %c0_i32_0 = arith.constant 0 : i32
    return %arg0, %c0_i32 : i32, i32
  }
}

</mosaic_0001>

<llo_original>
// kernel: tpu_custom_call.1
$region0: #{tpu_custom_call.1}
  #allocation0 [shape = 'u32[]', space=smem, size = 0x4, offset = 0x4, fixed_abs, tag = 'smem constant byte address 0x4 - core index']
  #allocation1 [shape = 'u32[144,128]{1,0:T(1,128)}', space=vmem, size = 0x12000, scoped, tag = 'internal scratch']
  %s0 = inlined_call_operand.hbm [shape: f32[8,16], index: 0, kind: input, shape index: {}]
  %s1 = inlined_call_operand.hbm [shape: f32[16,128], index: 1, kind: input, shape index: {}]
  %s2 = inlined_call_operand.vmem [shape: f32[1,128], index: 2, kind: input, shape index: {}]
  %s3 = inlined_call_operand.hbm [shape: f32[8,128], index: 3, kind: output, shape index: {}]
  %s4 = sld [smem:[#allocation0]]
  $region30: #{tpu_custom_call.1} parent=0
    _
  %s6 = ssub.s32 1, %s4
  %s7 = scalar_select 0, %s6, %s4
  $region1: #{tpu_custom_call.1} parent=0
    #allocation2 [shape = 'u8[4096]{0}', space=vmem, size = 0x1000, scoped, tag = 'input window, operand 0, single buffered']
    #allocation3 [shape = 's32[1]{0}', space=sflag, size = 0x4, scoped, tag = 'scoped memory for tpu_custom_call.1']
    #allocation4 [shape = 's32[1]{0}', space=sflag, size = 0x4, scoped, tag = 'scoped memory for tpu_custom_call.1']
    #allocation5 [shape = 'u8[8192]{0}', space=vmem, size = 0x2000, scoped, tag = 'input window, operand 1, single buffered']
    #allocation6 [shape = 's32[1]{0}', space=sflag, size = 0x4, scoped, tag = 'scoped memory for tpu_custom_call.1']
    #allocation7 [shape = 'u8[4096]{0}', space=vmem, size = 0x1000, scoped, tag = 'output window, operand 0, single buffered']
    %8 = vsyncpa [#allocation3], 0
    %9 = vsyncpa [#allocation6], 0
    %10 = vsyncpa [#allocation4], 0
    // Predicated region
    $region2: #{tpu_custom_call.1} parent=1 // pred_check
      _
    $region3: #{tpu_custom_call.1} parent=1 // pred_check_branch
      %12 = sbr.rel (0) target = $region5
    $region4: #{tpu_custom_call.1} parent=1 // pred_region
      %s14 = ssub.s32 128, 128
      %15 = vsyncadd [#allocation3], %s14
      %s17 = sshll.u32 [#allocation2], 4
      %s18 = int_to_ptr.vmem [resolvable:$true] %s17
      %20 = dma.hbm_to_vmem [thread:$0]  %s0, 128, %s18, [#allocation3]
    $region5: #{tpu_custom_call.1} parent=1 // pred_fallthru
      _
    // Predicated region
    $region6: #{tpu_custom_call.1} parent=1 // pred_check
      _
    $region7: #{tpu_custom_call.1} parent=1 // pred_check_branch
      %22 = sbr.rel (0) target = $region9
    $region8: #{tpu_custom_call.1} parent=1 // pred_region
      %s24 = ssub.s32 256, 256
      %25 = vsyncadd [#allocation6], %s24
      %s26 = sshll.u32 [#allocation5], 4
      %s27 = int_to_ptr.vmem [resolvable:$true] %s26
      %32 = dma.hbm_to_vmem [thread:$0]  %s1, 256, %s27, [#allocation6], 128, 128, 8
    $region9: #{tpu_custom_call.1} parent=1 // pred_fallthru
      _
    // Predicated region
    $region10: #{tpu_custom_call.1} parent=1 // pred_check
      _
    $region11: #{tpu_custom_call.1} parent=1 // pred_check_branch
      %34 = sbr.rel (0) target = $region13
    $region12: #{tpu_custom_call.1} parent=1 // pred_region
      _
    $region13: #{tpu_custom_call.1} parent=1 // pred_fallthru
      _
    // Predicated region
    $region14: #{tpu_custom_call.1} parent=1 // pred_check
      _
    $region15: #{tpu_custom_call.1} parent=1 // pred_check_branch
      %36 = sbr.rel (0) target = $region17
    $region16: #{tpu_custom_call.1} parent=1 // pred_region
      %37 = dma.done [#allocation3], 128
    $region17: #{tpu_custom_call.1} parent=1 // pred_fallthru
      _
    // Predicated region
    $region18: #{tpu_custom_call.1} parent=1 // pred_check
      _
    $region19: #{tpu_custom_call.1} parent=1 // pred_check_branch
      %39 = sbr.rel (0) target = $region21
    $region20: #{tpu_custom_call.1} parent=1 // pred_region
      %40 = dma.done [#allocation6], 256
    $region21: #{tpu_custom_call.1} parent=1 // pred_fallthru
      _
    %v41 = vld [vmem:[#allocation2] sm:$0xff]
    %v42 = vld [vmem:[#allocation5] sm:$0xff]
    %v43 = vld [vmem:[#allocation5 + $0x8] sm:$0xff]
    %v44 = vld [vmem:[%s2] sm:$0x1]
    %v46 = vlaneseq
    %v47 = vshrl.u32 %v46, 7
    %v48 = vsub.s32 0, %v47
    %v49 = vrot.slane %v44, %v48
    %vm51 = vcmask 130048
    %v53 = vsel %vm51, %v41, 0
    %55 = vmatprep.subr.mxu0 0.0
    %56 = vmatpush1.msra.mxu0 0.0
    %57 = vmatprep.subr.mxu0 0.0
    %58 = vmatpush1.msra.mxu0 0.0
    %59 = vmatprep.subr.mxu0 0.0
    %60 = vmatpush1.msra.mxu0 0.0
    %61 = vmatprep.subr.mxu0 0.0
    %62 = vmatpush1.msra.mxu0 0.0
    %63 = vmatprep.subr.mxu0 0.0
    %64 = vmatpush1.msra.mxu0 0.0
    %65 = vmatprep.subr.mxu0 0.0
    %66 = vmatpush1.msra.mxu0 0.0
    %67 = vmatprep.subr.mxu0 0.0
    %68 = vmatpush1.msra.mxu0 0.0
    %69 = vmatprep.subr.mxu0 0.0
    %70 = vmatpush1.msra.mxu0 0.0
    %71 = vmatprep.subr.mxu0 0.0
    %72 = vmatpush1.msra.mxu0 0.0
    %73 = vmatprep.subr.mxu0 0.0
    %74 = vmatpush1.msra.mxu0 0.0
    %75 = vmatprep.subr.mxu0 0.0
    %76 = vmatpush1.msra.mxu0 0.0
    %77 = vmatprep.subr.mxu0 0.0
    %78 = vmatpush1.msra.mxu0 0.0
    %79 = vmatprep.subr.mxu0 0.0
    %80 = vmatpush1.msra.mxu0 0.0
    %81 = vmatprep.subr.mxu0 0.0
    %82 = vmatpush1.msra.mxu0 0.0
    %83 = vmatprep.subr.mxu0 0.0
    %84 = vmatpush1.msra.mxu0 %v43
    %85 = vmatprep.subr.mxu0 0.0
    %86 = vmatpush1.msra.mxu0 %v42
    %87 = vmatprep.subr.mxu0 0.0
    %88 = vmatpush2.msra.mxu0 0.0
    %89 = vmatprep.subr.mxu0 0.0
    %90 = vmatpush2.msra.mxu0 0.0
    %91 = vmatprep.subr.mxu0 0.0
    %92 = vmatpush2.msra.mxu0 0.0
    %93 = vmatprep.subr.mxu0 0.0
    %94 = vmatpush2.msra.mxu0 0.0
    %95 = vmatprep.subr.mxu0 0.0
    %96 = vmatpush2.msra.mxu0 0.0
    %97 = vmatprep.subr.mxu0 0.0
    %98 = vmatpush2.msra.mxu0 0.0
    %99 = vmatprep.subr.mxu0 0.0
    %100 = vmatpush2.msra.mxu0 0.0
    %101 = vmatprep.subr.mxu0 0.0
    %102 = vmatpush2.msra.mxu0 0.0
    %103 = vmatprep.subr.mxu0 0.0
    %104 = vmatpush2.msra.mxu0 0.0
    %105 = vmatprep.subr.mxu0 0.0
    %106 = vmatpush2.msra.mxu0 0.0
    %107 = vmatprep.subr.mxu0 0.0
    %108 = vmatpush2.msra.mxu0 0.0
    %109 = vmatprep.subr.mxu0 0.0
    %110 = vmatpush2.msra.mxu0 0.0
    %111 = vmatprep.subr.mxu0 0.0
    %112 = vmatpush2.msra.mxu0 0.0
    %113 = vmatprep.subr.mxu0 0.0
    %114 = vmatpush2.msra.mxu0 0.0
    %115 = vmatprep.subr.mxu0 0.0
    %116 = vmatpush2.msra.mxu0 0.0
    %117 = vmatprep.subr.mxu0 0.0
    %118 = vmatpush2.msra.mxu0 0.0
    %119 = vmatprep.mubr.f32.mxu0 0.0
    %120 = vmatmul.mubr.f32.gmra.mxu0 %v53
    %v121 = vpop.f32.mrf.mxu0
    %v122 = vadd.f32 %v49, %v121
    %v123 = vpop.f32.mrf.mxu0
    %124 = vdwg.mxu0
    %v125 = vmin.f32 %v122, 20.0
    %v126 = vmul.f32 %v125, 1.442695
    %v127 = vpow.pop %v126
    %v128 = vadd.f32 %v127, 1.0
    %v129 = vmul.f32 %v128, %v128
    %v130 = vsub.f32 %v129, 1.0
    %v131 = vadd.f32 %v129, 1.0
    %v132 = vrcp.pop %v131
    %v133 = vmul.f32 %v130, %v132
    %v134 = vmul.f32 %v122, %v133
    %vm135 = vcmp.gt.f32.partialorder %v122, 20.0
    %v136 = vsel %vm135, %v122, %v134
    %137 = vst [vmem:[#allocation7] sm:$0xff] %v136
    // Predicated region
    $region22: #{tpu_custom_call.1} parent=1 // pred_check
      _
    $region23: #{tpu_custom_call.1} parent=1 // pred_check_branch
      %139 = sbr.rel (0) target = $region25
    $region24: #{tpu_custom_call.1} parent=1 // pred_region
      %s141 = ssub.s32 128, 128
      %142 = vsyncadd [#allocation4], %s141
      %s144 = sshll.u32 [#allocation7], 4
      %s145 = int_to_ptr.vmem [resolvable:$true] %s144
      %147 = dma.vmem_to_hbm [thread:$0]  %s145, 128, %s3, [#allocation4]
    $region25: #{tpu_custom_call.1} parent=1 // pred_fallthru
      _
    // Predicated region
    $region26: #{tpu_custom_call.1} parent=1 // pred_check
      _
    $region27: #{tpu_custom_call.1} parent=1 // pred_check_branch
      %149 = sbr.rel (0) target = $region29
    $region28: #{tpu_custom_call.1} parent=1 // pred_region
      %150 = dma.done [#allocation4], 128
    $region29: #{tpu_custom_call.1} parent=1 // pred_fallthru
      _
    %151 = vsyncpa [#allocation3], 1
    %152 = vsyncpa [#allocation6], 1
    %153 = vsyncpa [#allocation4], 1

</llo_original>
